<compile_context>
chip_gen: v5e
topology: v5e:2x2
jax: 0.10.0
libtpu: 0.0.40
codegen_flags: <defaults>
</compile_context>

<pallas_src>
import jax
import jax.numpy as jnp
from jax.experimental import pallas as pl
from jax.experimental.pallas import tpu as pltpu


# ----------------------------------------------------------------------------
# Fused tail kernel:  relu(x @ W_pre + b_pre) @ w3 + b3
# ----------------------------------------------------------------------------
def _fused_tail_kernel(x_ref, wpre_ref, bpre_ref, w3_ref, b3_ref, o_ref):
    x = x_ref[...]                       # (tm, Cin) f32
    cin = x_ref.shape[1]                 # static block shape

    # VPU prefix: relu(x @ W_pre + b_pre).  K = Cin is tiny (2), so this is a
    # couple of broadcast-multiply-adds per output vreg instead of an MXU pass.
    h = x[:, 0:1] * wpre_ref[0:1, :]
    for c in range(1, cin):
        h = h + x[:, c:c + 1] * wpre_ref[c:c + 1, :]
    h = jnp.maximum(h + bpre_ref[...], 0.0)            # (tm, end_ch) f32

    # end_conv_2 on the MXU: bf16 operands, f32 accumulation.
    o = jnp.dot(h.astype(w3_ref.dtype), w3_ref[...],
                preferred_element_type=jnp.float32)     # (tm, 128)
    o_ref[...] = (o + b3_ref[...]).astype(o_ref.dtype)


def _round_up(x, m):
    return (x + m - 1) // m * m


def _pick_tm(m_rows):
    # Largest tile in {512, 256, 128} that keeps >= 2 grid steps (keeps both
    # v7x TensorCores busy); 128 is already MXU-aligned on v5e.
    for tm in (512, 256, 128):
        if pl.cdiv(m_rows, tm) >= 2:
            return tm
    return 128


def fused_tail(rows, w_pre, b_pre, w3, b3, *, tm=None):
    """rows: (M, Cin) f32.  w_pre: (Cin, E) f32, b_pre: (1, E) f32,
    w3: (E, 128) bf16 (lane-padded), b3: (1, 128) f32.  Returns (M, 128) f32."""
    M, Cin = rows.shape
    Np = w3.shape[1]
    if tm is None:
        tm = _pick_tm(M)

    def full_spec(arr):
        return pl.BlockSpec(arr.shape, lambda i: (0, 0))

    return pl.pallas_call(
        _fused_tail_kernel,
        out_shape=jax.ShapeDtypeStruct((M, Np), jnp.float32),
        grid_spec=pltpu.PrefetchScalarGridSpec(
            num_scalar_prefetch=0,
            grid=(pl.cdiv(M, tm),),          # partial last block handled by Pallas
            in_specs=[
                pl.BlockSpec((tm, Cin), lambda i: (i, 0)),
                full_spec(w_pre), full_spec(b_pre),
                full_spec(w3), full_spec(b3),
            ],
            out_specs=pl.BlockSpec((tm, Np), lambda i: (i, 0)),
        ),
        compiler_params=pltpu.CompilerParams(
            dimension_semantics=("parallel",)),
    )(rows, w_pre, b_pre, w3, b3)


# ----------------------------------------------------------------------------
# Parameters
# ----------------------------------------------------------------------------
def init_ts_encoder_params(key, *, num_nodes, history_len, in_dim=2, out_dim=12,
                           residual_channels=32, skip_channels=256,
                           end_channels=512, emb_channels=16, kt=3,
                           num_supports=2):
    ks = jax.random.split(key, 12)
    s = 0.1
    params = {
        "nodevec1": jax.random.normal(ks[0], (num_nodes, 10), jnp.float32),
        "nodevec2": jax.random.normal(ks[1], (10, num_nodes), jnp.float32),
        # nn.Linear(history_len, 1, bias=False) -> stored as (history_len, 1)
        "reduce_stamp_w": s * jax.random.normal(ks[2], (history_len, 1), jnp.float32),
        # nn.Linear(emb_channels, kt + 1)
        "temp1_w": s * jax.random.normal(ks[3], (emb_channels, kt + 1), jnp.float32),
        "temp1_b": s * jax.random.normal(ks[4], (kt + 1,), jnp.float32),
        # start_conv: Conv2d(in_dim, residual_channels, 1x1) stored as (C_in, C_out)
        "start_w": s * jax.random.normal(ks[5], (in_dim, residual_channels), jnp.float32),
        "start_b": s * jax.random.normal(ks[6], (residual_channels,), jnp.float32),
        # placeholder for the (externally defined) DilatedConvEncoder: res -> skip
        "fe_w": s * jax.random.normal(ks[7], (residual_channels, skip_channels), jnp.float32),
        "fe_b": s * jax.random.normal(ks[8], (skip_channels,), jnp.float32),
        # end_conv_1: Conv2d(skip_channels, end_channels, 1x1)
        "end1_w": s * jax.random.normal(ks[9], (skip_channels, end_channels), jnp.float32),
        "end1_b": s * jax.random.normal(ks[10], (end_channels,), jnp.float32),
        # end_conv_2: Conv2d(end_channels, out_dim, 1x1)
        "end2_w": s * jax.random.normal(ks[11], (end_channels, out_dim), jnp.float32),
        "end2_b": jnp.zeros((out_dim,), jnp.float32),
        # fixed graph supports (list of (N, N)); consumed by the real feature_extractor
        "supports": [jnp.eye(num_nodes, dtype=jnp.float32)
                     for _ in range(num_supports)],
    }
    return params


def prepare_kernel_params(params):
    """One-time kernel weight prep (kept out of the hot forward).

    Folds the affine prefix start_conv -> fe(placeholder 1x1) -> end_conv_1 in
    f32, and lane-pads end_conv_2 to 128 output lanes (bf16 weight, f32 bias).
    NOTE: the full fold is only valid for the placeholder FE; with the real
    DilatedConvEncoder only the start_conv fold into its first conv survives.
    """
    w_pre = params["start_w"] @ params["fe_w"] @ params["end1_w"]        # (Cin, E)
    b_pre = (params["start_b"] @ params["fe_w"] + params["fe_b"]) \
        @ params["end1_w"] + params["end1_b"]                            # (E,)
    out_dim = params["end2_w"].shape[1]
    n_out_p = _round_up(out_dim, 128)
    w3 = jnp.zeros((params["end2_w"].shape[0], n_out_p), jnp.bfloat16
                   ).at[:, :out_dim].set(params["end2_w"].astype(jnp.bfloat16))
    b3 = jnp.zeros((1, n_out_p), jnp.float32
                   ).at[0, :out_dim].set(params["end2_b"].astype(jnp.float32))
    return {
        "w_pre": w_pre.astype(jnp.float32),
        "b_pre": b_pre[None, :].astype(jnp.float32),
        "w3": w3,
        "b3": b3,
    }


# ----------------------------------------------------------------------------
# TSEncoder forward
# ----------------------------------------------------------------------------
def ts_encoder_forward(params, kparams, x, time_emb, mask):
    """x: (B, T, num_nodes, in_dim), time_emb: (B, history_len, emb_channels).
    `mask` is accepted but unused, matching the reference forward."""
    del mask
    B, T, N, Cin = x.shape
    out_dim = params["end2_w"].shape[1]

    # adp = softmax(relu(nodevec1 @ nodevec2), dim=1); supports = supports + [adp].
    # Tiny (NxN): plain XLA (a Pallas launch is pure overhead here).
    adp = jax.nn.softmax(
        jnp.maximum(params["nodevec1"] @ params["nodevec2"], 0.0), axis=1)
    supports = params["supports"] + [adp]  # noqa: F841 (consumed by the real FE)

    # period_emb = reduce_stamp(time_emb.permute(0,2,1)).squeeze(2); temp_1 = Linear.
    period_emb = jnp.einsum("bhe,ho->beo", time_emb, params["reduce_stamp_w"])[..., 0]
    temp_1 = period_emb @ params["temp1_w"] + params["temp1_b"]

    # PyTorch: transpose(1,2) twice cancels; transpose(1,3) -> NCHW (B,Cin,N,T);
    # F.pad(x, (1,0,0,0)) left-pads the time axis.  Channels-last equivalent:
    xcl = jnp.transpose(x, (0, 2, 1, 3))                       # (B, N, T, Cin)
    xcl = jnp.pad(xcl, ((0, 0), (0, 0), (1, 0), (0, 0)))       # (B, N, T+1, Cin)
    Tp = T + 1
    rows = xcl.reshape(B * N * Tp, Cin).astype(jnp.float32)

    # Fused tail: relu(x @ W_pre + b_pre) @ w3 + b3 in one pallas_call.
    # TODO(synk): DilatedConvEncoder's class definition is not provided in the
    # reference source; stand-in is a single 1x1 projection residual->skip, so
    # `supports`/`temp_1` are computed (as in the reference) but not consumed here.
    h = fused_tail(rows, kparams["w_pre"], kparams["b_pre"],
                   kparams["w3"], kparams["b3"])

    out = h[:, :out_dim].reshape(B, N, Tp, out_dim)
    out = jnp.transpose(out, (0, 3, 1, 2))   # NCHW: (B, out_dim, N, T+1)
    return out, adp, temp_1


# ----------------------------------------------------------------------------
# Pure-JAX f32 reference (same placeholder FE) for a tolerance check
# ----------------------------------------------------------------------------
def ts_encoder_reference(params, x, time_emb):
    adp = jax.nn.softmax(
        jnp.maximum(params["nodevec1"] @ params["nodevec2"], 0.0), axis=1)
    period_emb = jnp.einsum("bhe,ho->beo", time_emb, params["reduce_stamp_w"])[..., 0]
    temp_1 = period_emb @ params["temp1_w"] + params["temp1_b"]
    B, T, N, Cin = x.shape
    xcl = jnp.transpose(x, (0, 2, 1, 3))
    xcl = jnp.pad(xcl, ((0, 0), (0, 0), (1, 0), (0, 0)))
    rows = xcl.reshape(B * N * (T + 1), Cin)
    h = rows @ params["start_w"] + params["start_b"]
    h = h @ params["fe_w"] + params["fe_b"]
    h = jnp.maximum(h @ params["end1_w"] + params["end1_b"], 0.0)
    h = h @ params["end2_w"] + params["end2_b"]
    out = jnp.transpose(h.reshape(B, N, T + 1, -1), (0, 3, 1, 2))
    return out, adp, temp_1


# ----------------------------------------------------------------------------
# Demo
# ----------------------------------------------------------------------------
if __name__ == "__main__":
    B, T, N, Cin = 2, 12, 8, 2
    history_len, emb_channels = 6, 16
    out_dim = 12

    key = jax.random.PRNGKey(0)
    kx, kt_, kp = jax.random.split(key, 3)

    params = init_ts_encoder_params(
        kp, num_nodes=N, history_len=history_len, in_dim=Cin, out_dim=out_dim,
        residual_channels=32, skip_channels=256, end_channels=512,
        emb_channels=emb_channels, kt=3, num_supports=2)
    kparams = prepare_kernel_params(params)   # one-time weight prep (perf review)

    x = jax.random.normal(kx, (B, T, N, Cin), jnp.float32)
    time_emb = jax.random.normal(kt_, (B, history_len, emb_channels), jnp.float32)
    mask = jnp.ones((B, T, N), jnp.float32)

    fwd = jax.jit(ts_encoder_forward)
    out, adp, temp_1 = fwd(params, kparams, x, time_emb, mask)
    jax.block_until_ready((out, adp, temp_1))

    assert out.shape == (B, out_dim, N, T + 1)
    assert adp.shape == (N, N)
    assert temp_1.shape == (B, 4)

    # Tolerance check vs. the pure-f32 reference (kernel uses bf16 end_conv_2
    # operands, so allow ~1e-2-scale deviation).
    ref_out, ref_adp, ref_temp = ts_encoder_reference(params, x, time_emb)
    assert jnp.allclose(out, ref_out, atol=5e-2, rtol=5e-2), \
        float(jnp.max(jnp.abs(out - ref_out)))
    assert jnp.allclose(adp, ref_adp, atol=1e-5, rtol=1e-5)
    assert jnp.allclose(temp_1, ref_temp, atol=1e-5, rtol=1e-5)

    print("KERNEL_OK")
</pallas_src>

<mosaic_0001>
module attributes {stable_mosaic.version = 11 : i64} {
  func.func @_fused_tail_kernel(%arg0: i32, %arg1: memref<128x2xf32, #tpu.memory_space<vmem>>, %arg2: memref<2x512xf32, #tpu.memory_space<vmem>>, %arg3: memref<1x512xf32, #tpu.memory_space<vmem>>, %arg4: memref<512x128xbf16, #tpu.memory_space<vmem>>, %arg5: memref<1x128xf32, #tpu.memory_space<vmem>>, %arg6: memref<128x128xf32, #tpu.memory_space<vmem>>) attributes {dimension_semantics = [#tpu.dimension_semantics<parallel>], iteration_bounds = array<i64: 2>, scalar_prefetch = 0 : i64, scratch_operands = 0 : i64, tpu.core_type = #tpu.core_type<tc>, window_params = [{transform_indices = @transform_0, window_bounds = array<i64: 128, 2>}, {pipeline_mode = #tpu.pipeline_mode<synchronous>, transform_indices = @transform_1, window_bounds = array<i64: 2, 512>}, {pipeline_mode = #tpu.pipeline_mode<synchronous>, transform_indices = @transform_2, window_bounds = array<i64: 1, 512>}, {pipeline_mode = #tpu.pipeline_mode<synchronous>, transform_indices = @transform_3, window_bounds = array<i64: 512, 128>}, {pipeline_mode = #tpu.pipeline_mode<synchronous>, transform_indices = @transform_4, window_bounds = array<i64: 1, 128>}, {transform_indices = @transform_5, window_bounds = array<i64: 128, 128>}]} {
    %c0 = arith.constant 0 : index
    %c0_0 = arith.constant 0 : index
    %0 = vector.load %arg1[%c0, %c0_0] : memref<128x2xf32, #tpu.memory_space<vmem>>, vector<128x2xf32>
    %1 = vector.extract_strided_slice %0 {offsets = [0, 0], sizes = [128, 1], strides = [1, 1]} : vector<128x2xf32> to vector<128x1xf32>
    %c0_1 = arith.constant 0 : index
    %c0_2 = arith.constant 0 : index
    %2 = vector.load %arg2[%c0_1, %c0_2] : memref<2x512xf32, #tpu.memory_space<vmem>>, vector<1x512xf32>
    %3 = vector.broadcast %1 : vector<128x1xf32> to vector<128x512xf32>
    %4 = vector.broadcast %2 : vector<1x512xf32> to vector<128x512xf32>
    %5 = arith.mulf %3, %4 : vector<128x512xf32>
    %6 = vector.extract_strided_slice %0 {offsets = [0, 1], sizes = [128, 1], strides = [1, 1]} : vector<128x2xf32> to vector<128x1xf32>
    %c1 = arith.constant 1 : index
    %c0_3 = arith.constant 0 : index
    %7 = vector.load %arg2[%c1, %c0_3] : memref<2x512xf32, #tpu.memory_space<vmem>>, vector<1x512xf32>
    %8 = vector.broadcast %6 : vector<128x1xf32> to vector<128x512xf32>
    %9 = vector.broadcast %7 : vector<1x512xf32> to vector<128x512xf32>
    %10 = arith.mulf %8, %9 : vector<128x512xf32>
    %11 = arith.addf %5, %10 : vector<128x512xf32>
    %c0_4 = arith.constant 0 : index
    %c0_5 = arith.constant 0 : index
    %12 = vector.load %arg3[%c0_4, %c0_5] : memref<1x512xf32, #tpu.memory_space<vmem>>, vector<1x512xf32>
    %13 = vector.broadcast %12 : vector<1x512xf32> to vector<128x512xf32>
    %14 = arith.addf %11, %13 : vector<128x512xf32>
    %cst = arith.constant 0.000000e+00 : f32
    %15 = vector.broadcast %cst : f32 to vector<128x512xf32>
    %16 = arith.maximumf %14, %15 : vector<128x512xf32>
    %17 = arith.truncf %16 : vector<128x512xf32> to vector<128x512xbf16>
    %c0_6 = arith.constant 0 : index
    %c0_7 = arith.constant 0 : index
    %18 = vector.load %arg4[%c0_6, %c0_7] : memref<512x128xbf16, #tpu.memory_space<vmem>>, vector<512x128xbf16>
    %cst_8 = arith.constant dense<0.000000e+00> : vector<128x128xf32>
    %19 = tpu.matmul %17, %18, %cst_8 {dimension_numbers = #tpu.dot_dimension_numbers<[1], [0], [0], [1], [0, 0, 1, 1], [], []>} : vector<128x512xbf16>, vector<512x128xbf16>, vector<128x128xf32> -> vector<128x128xf32>
    %c0_9 = arith.constant 0 : index
    %c0_10 = arith.constant 0 : index
    %20 = vector.load %arg5[%c0_9, %c0_10] : memref<1x128xf32, #tpu.memory_space<vmem>>, vector<1x128xf32>
    %21 = vector.broadcast %20 : vector<1x128xf32> to vector<128x128xf32>
    %22 = arith.addf %19, %21 : vector<128x128xf32>
    %c0_11 = arith.constant 0 : index
    %c0_12 = arith.constant 0 : index
    %23 = vector.load %arg6[%c0_11, %c0_12] : memref<128x128xf32, #tpu.memory_space<vmem>>, vector<128x128xf32>
    tpu.vector_store %arg6[%c0_11, %c0_12], %22 {strides = array<i32>} : memref<128x128xf32, #tpu.memory_space<vmem>>, vector<128x128xf32>,
    return
  }
  func.func @transform_0(%arg0: i32) -> (i32, i32) {
    %c0_i32 = arith.constant 0 : i32
    %c0_i32_0 = arith.constant 0 : i32
    return %arg0, %c0_i32 : i32, i32
  }
  func.func @transform_1(%arg0: i32) -> (i32, i32) {
    %c0_i32 = arith.constant 0 : i32
    %c0_i32_0 = arith.constant 0 : i32
    %c0_i32_1 = arith.constant 0 : i32
    return %c0_i32, %c0_i32_0 : i32, i32
  }
  func.func @transform_2(%arg0: i32) -> (i32, i32) {
    %c0_i32 = arith.constant 0 : i32
    %c0_i32_0 = arith.constant 0 : i32
    %c0_i32_1 = arith.constant 0 : i32
    return %c0_i32, %c0_i32_0 : i32, i32
  }
  func.func @transform_3(%arg0: i32) -> (i32, i32) {
    %c0_i32 = arith.constant 0 : i32
    %c0_i32_0 = arith.constant 0 : i32
    %c0_i32_1 = arith.constant 0 : i32
    return %c0_i32, %c0_i32_0 : i32, i32
  }
  func.func @transform_4(%arg0: i32) -> (i32, i32) {
    %c0_i32 = arith.constant 0 : i32
    %c0_i32_0 = arith.constant 0 : i32
    %c0_i32_1 = arith.constant 0 : i32
    return %c0_i32, %c0_i32_0 : i32, i32
  }
  func.func @transform_5(%arg0: i32) -> (i32, i32) {
    %c0_i32 = arith.constant 0 : i32
    %c0_i32_0 = arith.constant 0 : i32
    return %arg0, %c0_i32 : i32, i32
  }
}

</mosaic_0001>

<llo_original>
// kernel: ts_encoder_forward.1
$region0: #{ts_encoder_forward.1}
  #allocation0 [shape = 'u32[]', space=smem, size = 0x4, offset = 0x4, fixed_abs, tag = 'smem constant byte address 0x4 - core index']
  #allocation1 [shape = 'u32[72,128]{1,0:T(1,128)}', space=vmem, size = 0x9000, scoped, tag = 'internal scratch']
  %s0 = inlined_call_operand.vmem [shape: f32[208,2], index: 0, kind: input, shape index: {}]
  %s1 = inlined_call_operand.vmem [shape: f32[2,512], index: 1, kind: input, shape index: {}]
  %s2 = inlined_call_operand.vmem [shape: f32[1,512], index: 2, kind: input, shape index: {}]
  %s3 = inlined_call_operand.vmem [shape: bf16[512,128], index: 3, kind: input, shape index: {}]
  %s4 = inlined_call_operand.vmem [shape: f32[1,128], index: 4, kind: input, shape index: {}]
  %s5 = inlined_call_operand.vmem [shape: f32[208,128], index: 5, kind: output, shape index: {}]
  %s6 = sld [smem:[#allocation0]]
  $region101: #{ts_encoder_forward.1} parent=0
    _
  %s8 = ssub.s32 1, %s6
  %s9 = scalar_select 0, %s8, %s6
  $region1: #{ts_encoder_forward.1} parent=0
    #allocation2 [shape = 'u8[131072]{0}', space=vmem, size = 0x20000, scoped, tag = 'output window, operand 0']
    loop: start=0, step=1, limit=4
    $region2: #{ts_encoder_forward.1} parent=1 // loop_pre_header
      _
    $region3: #{ts_encoder_forward.1} parent=1 // loop_header
      %s11 = sphi 0, %s15
      %p12 = scmp.ge.s32.totalorder %s11, 4
      %s21 = sphi 0, %s23
      %s24 = sphi 0, %s21
      %s25 = sphi 0, %s24
      %s41 = sphi 0, %s25
      %s45 = sphi 0, %s45
      %s47 = sphi 0, %s45
      %s48 = sphi 0, %s47
      %s62 = sphi 0, %s48
      %s66 = sphi 0, %s66
      %s68 = sphi 0, %s66
      %s69 = sphi 0, %s68
      %s83 = sphi 0, %s69
      %s87 = sphi 0, %s87
      %s89 = sphi 0, %s87
      %s90 = sphi 0, %s89
      %s104 = sphi 0, %s90
      %s108 = sphi 0, %s108
      %s110 = sphi 0, %s108
      %s111 = sphi 0, %s110
      %s125 = sphi 0, %s111
      %s131 = sphi 0, %s133
      %s134 = sphi 0, %s131
      %s135 = sphi 0, %s134
      %s151 = sphi 0, %s135
    $region4: #{ts_encoder_forward.1} parent=1 // loop_header_branch
      %14 = sbr.rel (%p12) target = $region8
    $region5: #{ts_encoder_forward.1} parent=1 // loop_body
      %s16 = ssub.s32 %s11, 1
      %s17 = ssub.s32 %s11, 2
      %s18 = sadd.s32 %s11, 1
      %s19 = ssub.s32 %s11, %s18
      %p20 = scmp.eq.s32.totalorder %s19, 0
      %s22 = sadd.s32 %s21, 1
      %s23 = scalar_select %p20, %s21, %s22
      %p26 = pneg %p20
      %p27 = scmp.eq.s32.totalorder %s11, 1
      %p28 = por %p26, %p27
      %p29 = scmp.ne.s32.totalorder %s21, %s24
      %p30 = scmp.eq.s32.totalorder %s11, 0
      %p31 = por %p29, %p30
      %p32 = scmp.ne.s32.totalorder %s21, %s24
      %p33 = scmp.eq.s32.totalorder %s16, 1
      %p34 = por %p32, %p33
      %p35 = scmp.ne.s32.totalorder %s24, %s25
      %p36 = scmp.eq.s32.totalorder %s16, 0
      %p37 = por %p35, %p36
      %p38 = scmp.ne.s32.totalorder %s24, %s25
      %p39 = scmp.eq.s32.totalorder %s17, 1
      %p40 = por %p38, %p39
      %p42 = scmp.ne.s32.totalorder %s25, %s41
      %p43 = scmp.eq.s32.totalorder %s17, 0
      %p44 = por %p42, %p43
      %s46 = sadd.s32 %s45, 1
      %p49 = scmp.eq.s32.totalorder %s11, 1
      %p50 = scmp.ne.s32.totalorder %s45, %s47
      %p51 = scmp.eq.s32.totalorder %s11, 0
      %p52 = por %p50, %p51
      %p53 = scmp.ne.s32.totalorder %s45, %s47
      %p54 = scmp.eq.s32.totalorder %s16, 1
      %p55 = por %p53, %p54
      %p56 = scmp.ne.s32.totalorder %s47, %s48
      %p57 = scmp.eq.s32.totalorder %s16, 0
      %p58 = por %p56, %p57
      %p59 = scmp.ne.s32.totalorder %s47, %s48
      %p60 = scmp.eq.s32.totalorder %s17, 1
      %p61 = por %p59, %p60
      %p63 = scmp.ne.s32.totalorder %s48, %s62
      %p64 = scmp.eq.s32.totalorder %s17, 0
      %p65 = por %p63, %p64
      %s67 = sadd.s32 %s66, 1
      %p70 = scmp.eq.s32.totalorder %s11, 1
      %p71 = scmp.ne.s32.totalorder %s66, %s68
      %p72 = scmp.eq.s32.totalorder %s11, 0
      %p73 = por %p71, %p72
      %p74 = scmp.ne.s32.totalorder %s66, %s68
      %p75 = scmp.eq.s32.totalorder %s16, 1
      %p76 = por %p74, %p75
      %p77 = scmp.ne.s32.totalorder %s68, %s69
      %p78 = scmp.eq.s32.totalorder %s16, 0
      %p79 = por %p77, %p78
      %p80 = scmp.ne.s32.totalorder %s68, %s69
      %p81 = scmp.eq.s32.totalorder %s17, 1
      %p82 = por %p80, %p81
      %p84 = scmp.ne.s32.totalorder %s69, %s83
      %p85 = scmp.eq.s32.totalorder %s17, 0
      %p86 = por %p84, %p85
      %s88 = sadd.s32 %s87, 1
      %p91 = scmp.eq.s32.totalorder %s11, 1
      %p92 = scmp.ne.s32.totalorder %s87, %s89
      %p93 = scmp.eq.s32.totalorder %s11, 0
      %p94 = por %p92, %p93
      %p95 = scmp.ne.s32.totalorder %s87, %s89
      %p96 = scmp.eq.s32.totalorder %s16, 1
      %p97 = por %p95, %p96
      %p98 = scmp.ne.s32.totalorder %s89, %s90
      %p99 = scmp.eq.s32.totalorder %s16, 0
      %p100 = por %p98, %p99
      %p101 = scmp.ne.s32.totalorder %s89, %s90
      %p102 = scmp.eq.s32.totalorder %s17, 1
      %p103 = por %p101, %p102
      %p105 = scmp.ne.s32.totalorder %s90, %s104
      %p106 = scmp.eq.s32.totalorder %s17, 0
      %p107 = por %p105, %p106
      %s109 = sadd.s32 %s108, 1
      %p112 = scmp.eq.s32.totalorder %s11, 1
      %p113 = scmp.ne.s32.totalorder %s108, %s110
      %p114 = scmp.eq.s32.totalorder %s11, 0
      %p115 = por %p113, %p114
      %p116 = scmp.ne.s32.totalorder %s108, %s110
      %p117 = scmp.eq.s32.totalorder %s16, 1
      %p118 = por %p116, %p117
      %p119 = scmp.ne.s32.totalorder %s110, %s111
      %p120 = scmp.eq.s32.totalorder %s16, 0
      %p121 = por %p119, %p120
      %p122 = scmp.ne.s32.totalorder %s110, %s111
      %p123 = scmp.eq.s32.totalorder %s17, 1
      %p124 = por %p122, %p123
      %p126 = scmp.ne.s32.totalorder %s111, %s125
      %p127 = scmp.eq.s32.totalorder %s17, 0
      %p128 = por %p126, %p127
      %s129 = ssub.s32 %s11, %s18
      %p130 = scmp.eq.s32.totalorder %s129, 0
      %s132 = sadd.s32 %s131, 1
      %s133 = scalar_select %p130, %s131, %s132
      %p136 = pneg %p130
      %p137 = scmp.eq.s32.totalorder %s11, 1
      %p138 = por %p136, %p137
      %p139 = scmp.ne.s32.totalorder %s131, %s134
      %p140 = scmp.eq.s32.totalorder %s11, 0
      %p141 = por %p139, %p140
      %p142 = scmp.ne.s32.totalorder %s131, %s134
      %p143 = scmp.eq.s32.totalorder %s16, 1
      %p144 = por %p142, %p143
      %p145 = scmp.ne.s32.totalorder %s134, %s135
      %p146 = scmp.eq.s32.totalorder %s16, 0
      %p147 = por %p145, %p146
      %p148 = scmp.ne.s32.totalorder %s134, %s135
      %p149 = scmp.eq.s32.totalorder %s17, 1
      %p150 = por %p148, %p149
      %p152 = scmp.ne.s32.totalorder %s135, %s151
      %p153 = scmp.eq.s32.totalorder %s17, 0
      %p154 = por %p152, %p153
      %p155 = scmp.le.s32.totalorder 1, %s11
      %p156 = scmp.lt.s32.totalorder %s11, 3
      %p157 = pnand %p155, %p156
      %p158 = pneg %p157
      // Predicated region
      $region9: #{ts_encoder_forward.1} parent=5 // pred_check
        _
      $region10: #{ts_encoder_forward.1} parent=5 // pred_check_branch
        %160 = sbr.rel (%p157) target = $region12
      $region11: #{ts_encoder_forward.1} parent=5 // pred_region
        %s161 = ssub.s32 %s11, 1
        // Predicated region
        $region13: #{ts_encoder_forward.1} parent=11 // pred_check
          %p162 = pneg %p58
        $region14: #{ts_encoder_forward.1} parent=11 // pred_check_branch
          %164 = sbr.rel (%p162) target = $region16
        $region15: #{ts_encoder_forward.1} parent=11 // pred_region
          _
        $region16: #{ts_encoder_forward.1} parent=11 // pred_fallthru
          _
        // Predicated region
        $region17: #{ts_encoder_forward.1} parent=11 // pred_check
          %p165 = pneg %p79
        $region18: #{ts_encoder_forward.1} parent=11 // pred_check_branch
          %167 = sbr.rel (%p165) target = $region20
        $region19: #{ts_encoder_forward.1} parent=11 // pred_region
          _
        $region20: #{ts_encoder_forward.1} parent=11 // pred_fallthru
          _
        // Predicated region
        $region21: #{ts_encoder_forward.1} parent=11 // pred_check
          %p168 = pneg %p100
        $region22: #{ts_encoder_forward.1} parent=11 // pred_check_branch
          %170 = sbr.rel (%p168) target = $region24
        $region23: #{ts_encoder_forward.1} parent=11 // pred_region
          _
        $region24: #{ts_encoder_forward.1} parent=11 // pred_fallthru
          _
        // Predicated region
        $region25: #{ts_encoder_forward.1} parent=11 // pred_check
          %p171 = pneg %p121
        $region26: #{ts_encoder_forward.1} parent=11 // pred_check_branch
          %173 = sbr.rel (%p171) target = $region28
        $region27: #{ts_encoder_forward.1} parent=11 // pred_region
          _
        $region28: #{ts_encoder_forward.1} parent=11 // pred_fallthru
          _
      $region12: #{ts_encoder_forward.1} parent=5 // pred_fallthru
        _
      %p174 = scmp.lt.s32.totalorder %s11, 2
      // Predicated region
      $region29: #{ts_encoder_forward.1} parent=5 // pred_check
        %p175 = pneg %p174
      $region30: #{ts_encoder_forward.1} parent=5 // pred_check_branch
        %177 = sbr.rel (%p175) target = $region32
      $region31: #{ts_encoder_forward.1} parent=5 // pred_region
        // Predicated region
        $region33: #{ts_encoder_forward.1} parent=31 // pred_check
          %p178 = pneg %p31
        $region34: #{ts_encoder_forward.1} parent=31 // pred_check_branch
          %180 = sbr.rel (%p178) target = $region36
        $region35: #{ts_encoder_forward.1} parent=31 // pred_region
          %s181 = smul.u32 16, %s11
          %s182 = ssub.s32 26, %s181
          %p183 = scmp.lt.s32.totalorder %s182, 16
          %s184 = scalar_select %p183, %s182, 16
          %s185 = smul.u32 8, %s184
          %p186 = scmp.lt.s32.totalorder %s181, 25
          %s187 = scalar_select %p186, %s181, 25
          %s188 = smul.addr %s187, 8
          %s189 = scalar_lea.vmem %s0, %s188
          %s190 = smul.u32 16, %s11
          %s191 = ssub.s32 26, %s190
          %p192 = scmp.lt.s32.totalorder %s191, 16
          %s193 = scalar_select %p192, %s191, 16
          %s194 = smul.u32 8, %s193
        $region36: #{ts_encoder_forward.1} parent=31 // pred_fallthru
          _
      $region32: #{ts_encoder_forward.1} parent=5 // pred_fallthru
        _
      %p195 = scmp.le.s32.totalorder 1, %s11
      %p196 = scmp.lt.s32.totalorder %s11, 3
      %p197 = pnand %p195, %p196
      %p198 = pneg %p197
      // Predicated region
      $region37: #{ts_encoder_forward.1} parent=5 // pred_check
        _
      $region38: #{ts_encoder_forward.1} parent=5 // pred_check_branch
        %200 = sbr.rel (%p197) target = $region40
      $region39: #{ts_encoder_forward.1} parent=5 // pred_region
        %s201 = ssub.s32 %s11, 1
        %s202 = smul.u32 16, %s16
        %s203 = ssub.s32 26, %s202
        %p204 = scmp.lt.s32.totalorder %s203, 16
        %s205 = scalar_select %p204, %s203, 16
        %s206 = smul.u32 8, %s205
        %p207 = scmp.lt.s32.totalorder %s202, 25
        %s208 = scalar_select %p207, %s202, 25
        %s209 = smul.addr %s208, 8
        %s210 = scalar_lea.vmem %s0, %s209
        %p211 = pneg %p37
        %p212 = pneg %p34
        %p213 = pneg %p58
        %p214 = pneg %p55
        %p215 = pneg %p79
        %p216 = pneg %p76
        %p217 = pneg %p100
        %p218 = pneg %p97
        %p219 = pneg %p121
        %p220 = pneg %p118
        %p221 = pneg %p147
        %p222 = pneg %p144
        %s223 = sand.u32 %s134, 1
        %s224 = sand.u32 %s134, 1
        %s225 = smul.addr %s224, 128
        %s226 = scalar_lea.vmem [#allocation2], %s225
        %s227 = smul.u32 16, %s16
        %s228 = ssub.s32 26, %s227
        %p229 = scmp.lt.s32.totalorder %s228, 16
        %s230 = scalar_select %p229, %s228, 16
        %s231 = smul.u32 8, %s230
        %p232 = scmp.lt.s32.totalorder %s227, 25
        %s233 = scalar_select %p232, %s227, 25
        %s234 = smul.addr %s233, 8
        %s235 = scalar_lea.vmem %s0, %s234
        %s236 = smul.u32 16, %s16
        %s237 = ssub.s32 26, %s236
        %p238 = scmp.lt.s32.totalorder %s237, 16
        %s239 = scalar_select %p238, %s237, 16
        %s240 = smul.u32 8, %s239
        %s241 = smul.u32 16, %s16
        %s242 = ssub.s32 26, %s241
        %p243 = scmp.lt.s32.totalorder %s242, 16
        %s244 = scalar_select %p243, %s242, 16
        %s245 = smul.u32 8, %s244
        %v246 = vld [vmem:[%s235] sm:$0xff]
        %v247 = vld [vmem:[%s235 + $0x8] sm:$0xff]
        %v248 = vld [vmem:[%s235 + $0x10] sm:$0xff]
        %v249 = vld [vmem:[%s235 + $0x18] sm:$0xff]
        %v250 = vld [vmem:[%s235 + $0x20] sm:$0xff]
        %v251 = vld [vmem:[%s235 + $0x28] sm:$0xff]
        %v252 = vld [vmem:[%s235 + $0x30] sm:$0xff]
        %v253 = vld [vmem:[%s235 + $0x38] sm:$0xff]
        %v254 = vld [vmem:[%s235 + $0x40] sm:$0xff]
        %v255 = vld [vmem:[%s235 + $0x48] sm:$0xff]
        %v256 = vld [vmem:[%s235 + $0x50] sm:$0xff]
        %v257 = vld [vmem:[%s235 + $0x58] sm:$0xff]
        %v258 = vld [vmem:[%s235 + $0x60] sm:$0xff]
        %v259 = vld [vmem:[%s235 + $0x68] sm:$0xff]
        %v260 = vld [vmem:[%s235 + $0x70] sm:$0xff]
        %v261 = vld [vmem:[%s235 + $0x78] sm:$0xff]
        %v262 = vld [vmem:[%s1] ss:$2 sm:$0xf]
        %264 = vset.pattern.permute.xlu0 0
        %265 = vperm.xlu0 %264, %v246
        %v266 = vpop.permute.xlu0 %265
        %269 = vset.pattern.permute.xlu0 0
        %270 = vperm.xlu0 %269, %v247
        %v271 = vpop.permute.xlu0 %270
        %274 = vset.pattern.permute.xlu0 0
        %275 = vperm.xlu0 %274, %v248
        %v276 = vpop.permute.xlu0 %275
        %279 = vset.pattern.permute.xlu0 0
        %280 = vperm.xlu0 %279, %v249
        %v281 = vpop.permute.xlu0 %280
        %284 = vset.pattern.permute.xlu0 0
        %285 = vperm.xlu0 %284, %v250
        %v286 = vpop.permute.xlu0 %285
        %289 = vset.pattern.permute.xlu0 0
        %290 = vperm.xlu0 %289, %v251
        %v291 = vpop.permute.xlu0 %290
        %294 = vset.pattern.permute.xlu0 0
        %295 = vperm.xlu0 %294, %v252
        %v296 = vpop.permute.xlu0 %295
        %299 = vset.pattern.permute.xlu0 0
        %300 = vperm.xlu0 %299, %v253
        %v301 = vpop.permute.xlu0 %300
        %304 = vset.pattern.permute.xlu0 0
        %305 = vperm.xlu0 %304, %v254
        %v306 = vpop.permute.xlu0 %305
        %309 = vset.pattern.permute.xlu0 0
        %310 = vperm.xlu0 %309, %v255
        %v311 = vpop.permute.xlu0 %310
        %314 = vset.pattern.permute.xlu0 0
        %315 = vperm.xlu0 %314, %v256
        %v316 = vpop.permute.xlu0 %315
        %319 = vset.pattern.permute.xlu0 0
        %320 = vperm.xlu0 %319, %v257
        %v321 = vpop.permute.xlu0 %320
        %324 = vset.pattern.permute.xlu0 0
        %325 = vperm.xlu0 %324, %v258
        %v326 = vpop.permute.xlu0 %325
        %329 = vset.pattern.permute.xlu0 0
        %330 = vperm.xlu0 %329, %v259
        %v331 = vpop.permute.xlu0 %330
        %334 = vset.pattern.permute.xlu0 0
        %335 = vperm.xlu0 %334, %v260
        %v336 = vpop.permute.xlu0 %335
        %339 = vset.pattern.permute.xlu0 0
        %340 = vperm.xlu0 %339, %v261
        %v341 = vpop.permute.xlu0 %340
        %v344 = vperm.slane %v262, 0
        %v345 = vperm.slane %v262, 1
        %v346 = vperm.slane %v262, 2
        %v347 = vperm.slane %v262, 3
        %v352 = vmul.f32 %v266, %v344
        %v353 = vmul.f32 %v266, %v345
        %v354 = vmul.f32 %v266, %v346
        %v355 = vmul.f32 %v266, %v347
        %v356 = vmul.f32 %v271, %v344
        %v357 = vmul.f32 %v271, %v345
        %v358 = vmul.f32 %v271, %v346
        %v359 = vmul.f32 %v271, %v347
        %v360 = vmul.f32 %v276, %v344
        %v361 = vmul.f32 %v276, %v345
        %v362 = vmul.f32 %v276, %v346
        %v363 = vmul.f32 %v276, %v347
        %v364 = vmul.f32 %v281, %v344
        %v365 = vmul.f32 %v281, %v345
        %v366 = vmul.f32 %v281, %v346
        %v367 = vmul.f32 %v281, %v347
        %v368 = vmul.f32 %v286, %v344
        %v369 = vmul.f32 %v286, %v345
        %v370 = vmul.f32 %v286, %v346
        %v371 = vmul.f32 %v286, %v347
        %v372 = vmul.f32 %v291, %v344
        %v373 = vmul.f32 %v291, %v345
        %v374 = vmul.f32 %v291, %v346
        %v375 = vmul.f32 %v291, %v347
        %v376 = vmul.f32 %v296, %v344
        %v377 = vmul.f32 %v296, %v345
        %v378 = vmul.f32 %v296, %v346
        %v379 = vmul.f32 %v296, %v347
        %v380 = vmul.f32 %v301, %v344
        %v381 = vmul.f32 %v301, %v345
        %v382 = vmul.f32 %v301, %v346
        %v383 = vmul.f32 %v301, %v347
        %v384 = vmul.f32 %v306, %v344
        %v385 = vmul.f32 %v306, %v345
        %v386 = vmul.f32 %v306, %v346
        %v387 = vmul.f32 %v306, %v347
        %v388 = vmul.f32 %v311, %v344
        %v389 = vmul.f32 %v311, %v345
        %v390 = vmul.f32 %v311, %v346
        %v391 = vmul.f32 %v311, %v347
        %v392 = vmul.f32 %v316, %v344
        %v393 = vmul.f32 %v316, %v345
        %v394 = vmul.f32 %v316, %v346
        %v395 = vmul.f32 %v316, %v347
        %v396 = vmul.f32 %v321, %v344
        %v397 = vmul.f32 %v321, %v345
        %v398 = vmul.f32 %v321, %v346
        %v399 = vmul.f32 %v321, %v347
        %v400 = vmul.f32 %v326, %v344
        %v401 = vmul.f32 %v326, %v345
        %v402 = vmul.f32 %v326, %v346
        %v403 = vmul.f32 %v326, %v347
        %v404 = vmul.f32 %v331, %v344
        %v405 = vmul.f32 %v331, %v345
        %v406 = vmul.f32 %v331, %v346
        %v407 = vmul.f32 %v331, %v347
        %v408 = vmul.f32 %v336, %v344
        %v409 = vmul.f32 %v336, %v345
        %v410 = vmul.f32 %v336, %v346
        %v411 = vmul.f32 %v336, %v347
        %v412 = vmul.f32 %v341, %v344
        %v413 = vmul.f32 %v341, %v345
        %v414 = vmul.f32 %v341, %v346
        %v415 = vmul.f32 %v341, %v347
        %s416 = scalar_lea.vmem %s1, 1
        %v417 = vld [vmem:[%s416] ss:$2 sm:$0xf]
        %418 = vset.pattern.permute.xlu0 1
        %419 = vperm.xlu0 %418, %v246
        %v420 = vpop.permute.xlu0 %419
        %422 = vset.pattern.permute.xlu0 1
        %423 = vperm.xlu0 %422, %v247
        %v424 = vpop.permute.xlu0 %423
        %426 = vset.pattern.permute.xlu0 1
        %427 = vperm.xlu0 %426, %v248
        %v428 = vpop.permute.xlu0 %427
        %430 = vset.pattern.permute.xlu0 1
        %431 = vperm.xlu0 %430, %v249
        %v432 = vpop.permute.xlu0 %431
        %434 = vset.pattern.permute.xlu0 1
        %435 = vperm.xlu0 %434, %v250
        %v436 = vpop.permute.xlu0 %435
        %438 = vset.pattern.permute.xlu0 1
        %439 = vperm.xlu0 %438, %v251
        %v440 = vpop.permute.xlu0 %439
        %442 = vset.pattern.permute.xlu0 1
        %443 = vperm.xlu0 %442, %v252
        %v444 = vpop.permute.xlu0 %443
        %446 = vset.pattern.permute.xlu0 1
        %447 = vperm.xlu0 %446, %v253
        %v448 = vpop.permute.xlu0 %447
        %450 = vset.pattern.permute.xlu0 1
        %451 = vperm.xlu0 %450, %v254
        %v452 = vpop.permute.xlu0 %451
        %454 = vset.pattern.permute.xlu0 1
        %455 = vperm.xlu0 %454, %v255
        %v456 = vpop.permute.xlu0 %455
        %458 = vset.pattern.permute.xlu0 1
        %459 = vperm.xlu0 %458, %v256
        %v460 = vpop.permute.xlu0 %459
        %462 = vset.pattern.permute.xlu0 1
        %463 = vperm.xlu0 %462, %v257
        %v464 = vpop.permute.xlu0 %463
        %466 = vset.pattern.permute.xlu0 1
        %467 = vperm.xlu0 %466, %v258
        %v468 = vpop.permute.xlu0 %467
        %470 = vset.pattern.permute.xlu0 1
        %471 = vperm.xlu0 %470, %v259
        %v472 = vpop.permute.xlu0 %471
        %474 = vset.pattern.permute.xlu0 1
        %475 = vperm.xlu0 %474, %v260
        %v476 = vpop.permute.xlu0 %475
        %478 = vset.pattern.permute.xlu0 1
        %479 = vperm.xlu0 %478, %v261
        %v480 = vpop.permute.xlu0 %479
        %v483 = vperm.slane %v417, 0
        %v484 = vperm.slane %v417, 1
        %v485 = vperm.slane %v417, 2
        %v486 = vperm.slane %v417, 3
        %v491 = vmul.f32 %v420, %v483
        %v492 = vmul.f32 %v420, %v484
        %v493 = vmul.f32 %v420, %v485
        %v494 = vmul.f32 %v420, %v486
        %v495 = vmul.f32 %v424, %v483
        %v496 = vmul.f32 %v424, %v484
        %v497 = vmul.f32 %v424, %v485
        %v498 = vmul.f32 %v424, %v486
        %v499 = vmul.f32 %v428, %v483
        %v500 = vmul.f32 %v428, %v484
        %v501 = vmul.f32 %v428, %v485
        %v502 = vmul.f32 %v428, %v486
        %v503 = vmul.f32 %v432, %v483
        %v504 = vmul.f32 %v432, %v484
        %v505 = vmul.f32 %v432, %v485
        %v506 = vmul.f32 %v432, %v486
        %v507 = vmul.f32 %v436, %v483
        %v508 = vmul.f32 %v436, %v484
        %v509 = vmul.f32 %v436, %v485
        %v510 = vmul.f32 %v436, %v486
        %v511 = vmul.f32 %v440, %v483
        %v512 = vmul.f32 %v440, %v484
        %v513 = vmul.f32 %v440, %v485
        %v514 = vmul.f32 %v440, %v486
        %v515 = vmul.f32 %v444, %v483
        %v516 = vmul.f32 %v444, %v484
        %v517 = vmul.f32 %v444, %v485
        %v518 = vmul.f32 %v444, %v486
        %v519 = vmul.f32 %v448, %v483
        %v520 = vmul.f32 %v448, %v484
        %v521 = vmul.f32 %v448, %v485
        %v522 = vmul.f32 %v448, %v486
        %v523 = vmul.f32 %v452, %v483
        %v524 = vmul.f32 %v452, %v484
        %v525 = vmul.f32 %v452, %v485
        %v526 = vmul.f32 %v452, %v486
        %v527 = vmul.f32 %v456, %v483
        %v528 = vmul.f32 %v456, %v484
        %v529 = vmul.f32 %v456, %v485
        %v530 = vmul.f32 %v456, %v486
        %v531 = vmul.f32 %v460, %v483
        %v532 = vmul.f32 %v460, %v484
        %v533 = vmul.f32 %v460, %v485
        %v534 = vmul.f32 %v460, %v486
        %v535 = vmul.f32 %v464, %v483
        %v536 = vmul.f32 %v464, %v484
        %v537 = vmul.f32 %v464, %v485
        %v538 = vmul.f32 %v464, %v486
        %v539 = vmul.f32 %v468, %v483
        %v540 = vmul.f32 %v468, %v484
        %v541 = vmul.f32 %v468, %v485
        %v542 = vmul.f32 %v468, %v486
        %v543 = vmul.f32 %v472, %v483
        %v544 = vmul.f32 %v472, %v484
        %v545 = vmul.f32 %v472, %v485
        %v546 = vmul.f32 %v472, %v486
        %v547 = vmul.f32 %v476, %v483
        %v548 = vmul.f32 %v476, %v484
        %v549 = vmul.f32 %v476, %v485
        %v550 = vmul.f32 %v476, %v486
        %v551 = vmul.f32 %v480, %v483
        %v552 = vmul.f32 %v480, %v484
        %v553 = vmul.f32 %v480, %v485
        %v554 = vmul.f32 %v480, %v486
        %v555 = vadd.f32 %v352, %v491
        %v556 = vadd.f32 %v353, %v492
        %v557 = vadd.f32 %v354, %v493
        %v558 = vadd.f32 %v355, %v494
        %v559 = vadd.f32 %v356, %v495
        %v560 = vadd.f32 %v357, %v496
        %v561 = vadd.f32 %v358, %v497
        %v562 = vadd.f32 %v359, %v498
        %v563 = vadd.f32 %v360, %v499
        %v564 = vadd.f32 %v361, %v500
        %v565 = vadd.f32 %v362, %v501
        %v566 = vadd.f32 %v363, %v502
        %v567 = vadd.f32 %v364, %v503
        %v568 = vadd.f32 %v365, %v504
        %v569 = vadd.f32 %v366, %v505
        %v570 = vadd.f32 %v367, %v506
        %v571 = vadd.f32 %v368, %v507
        %v572 = vadd.f32 %v369, %v508
        %v573 = vadd.f32 %v370, %v509
        %v574 = vadd.f32 %v371, %v510
        %v575 = vadd.f32 %v372, %v511
        %v576 = vadd.f32 %v373, %v512
        %v577 = vadd.f32 %v374, %v513
        %v578 = vadd.f32 %v375, %v514
        %v579 = vadd.f32 %v376, %v515
        %v580 = vadd.f32 %v377, %v516
        %v581 = vadd.f32 %v378, %v517
        %v582 = vadd.f32 %v379, %v518
        %v583 = vadd.f32 %v380, %v519
        %v584 = vadd.f32 %v381, %v520
        %v585 = vadd.f32 %v382, %v521
        %v586 = vadd.f32 %v383, %v522
        %v587 = vadd.f32 %v384, %v523
        %v588 = vadd.f32 %v385, %v524
        %v589 = vadd.f32 %v386, %v525
        %v590 = vadd.f32 %v387, %v526
        %v591 = vadd.f32 %v388, %v527
        %v592 = vadd.f32 %v389, %v528
        %v593 = vadd.f32 %v390, %v529
        %v594 = vadd.f32 %v391, %v530
        %v595 = vadd.f32 %v392, %v531
        %v596 = vadd.f32 %v393, %v532
        %v597 = vadd.f32 %v394, %v533
        %v598 = vadd.f32 %v395, %v534
        %v599 = vadd.f32 %v396, %v535
        %v600 = vadd.f32 %v397, %v536
        %v601 = vadd.f32 %v398, %v537
        %v602 = vadd.f32 %v399, %v538
        %v603 = vadd.f32 %v400, %v539
        %v604 = vadd.f32 %v401, %v540
        %v605 = vadd.f32 %v402, %v541
        %v606 = vadd.f32 %v403, %v542
        %v607 = vadd.f32 %v404, %v543
        %v608 = vadd.f32 %v405, %v544
        %v609 = vadd.f32 %v406, %v545
        %v610 = vadd.f32 %v407, %v546
        %v611 = vadd.f32 %v408, %v547
        %v612 = vadd.f32 %v409, %v548
        %v613 = vadd.f32 %v410, %v549
        %v614 = vadd.f32 %v411, %v550
        %v615 = vadd.f32 %v412, %v551
        %v616 = vadd.f32 %v413, %v552
        %v617 = vadd.f32 %v414, %v553
        %v618 = vadd.f32 %v415, %v554
        %v619 = vld [vmem:[%s2] sm:$0xf]
        %v621 = vperm.slane %v619, 0
        %v622 = vperm.slane %v619, 1
        %v623 = vperm.slane %v619, 2
        %v624 = vperm.slane %v619, 3
        %v629 = vadd.f32 %v555, %v621
        %v630 = vadd.f32 %v556, %v622
        %v631 = vadd.f32 %v557, %v623
        %v632 = vadd.f32 %v558, %v624
        %v633 = vadd.f32 %v559, %v621
        %v634 = vadd.f32 %v560, %v622
        %v635 = vadd.f32 %v561, %v623
        %v636 = vadd.f32 %v562, %v624
        %v637 = vadd.f32 %v563, %v621
        %v638 = vadd.f32 %v564, %v622
        %v639 = vadd.f32 %v565, %v623
        %v640 = vadd.f32 %v566, %v624
        %v641 = vadd.f32 %v567, %v621
        %v642 = vadd.f32 %v568, %v622
        %v643 = vadd.f32 %v569, %v623
        %v644 = vadd.f32 %v570, %v624
        %v645 = vadd.f32 %v571, %v621
        %v646 = vadd.f32 %v572, %v622
        %v647 = vadd.f32 %v573, %v623
        %v648 = vadd.f32 %v574, %v624
        %v649 = vadd.f32 %v575, %v621
        %v650 = vadd.f32 %v576, %v622
        %v651 = vadd.f32 %v577, %v623
        %v652 = vadd.f32 %v578, %v624
        %v653 = vadd.f32 %v579, %v621
        %v654 = vadd.f32 %v580, %v622
        %v655 = vadd.f32 %v581, %v623
        %v656 = vadd.f32 %v582, %v624
        %v657 = vadd.f32 %v583, %v621
        %v658 = vadd.f32 %v584, %v622
        %v659 = vadd.f32 %v585, %v623
        %v660 = vadd.f32 %v586, %v624
        %v661 = vadd.f32 %v587, %v621
        %v662 = vadd.f32 %v588, %v622
        %v663 = vadd.f32 %v589, %v623
        %v664 = vadd.f32 %v590, %v624
        %v665 = vadd.f32 %v591, %v621
        %v666 = vadd.f32 %v592, %v622
        %v667 = vadd.f32 %v593, %v623
        %v668 = vadd.f32 %v594, %v624
        %v669 = vadd.f32 %v595, %v621
        %v670 = vadd.f32 %v596, %v622
        %v671 = vadd.f32 %v597, %v623
        %v672 = vadd.f32 %v598, %v624
        %v673 = vadd.f32 %v599, %v621
        %v674 = vadd.f32 %v600, %v622
        %v675 = vadd.f32 %v601, %v623
        %v676 = vadd.f32 %v602, %v624
        %v677 = vadd.f32 %v603, %v621
        %v678 = vadd.f32 %v604, %v622
        %v679 = vadd.f32 %v605, %v623
        %v680 = vadd.f32 %v606, %v624
        %v681 = vadd.f32 %v607, %v621
        %v682 = vadd.f32 %v608, %v622
        %v683 = vadd.f32 %v609, %v623
        %v684 = vadd.f32 %v610, %v624
        %v685 = vadd.f32 %v611, %v621
        %v686 = vadd.f32 %v612, %v622
        %v687 = vadd.f32 %v613, %v623
        %v688 = vadd.f32 %v614, %v624
        %v689 = vadd.f32 %v615, %v621
        %v690 = vadd.f32 %v616, %v622
        %v691 = vadd.f32 %v617, %v623
        %v692 = vadd.f32 %v618, %v624
        %v693 = vmax.f32 %v629, 0.0
        %v694 = vmax.f32 %v630, 0.0
        %v695 = vmax.f32 %v631, 0.0
        %v696 = vmax.f32 %v632, 0.0
        %v697 = vmax.f32 %v633, 0.0
        %v698 = vmax.f32 %v634, 0.0
        %v699 = vmax.f32 %v635, 0.0
        %v700 = vmax.f32 %v636, 0.0
        %v701 = vmax.f32 %v637, 0.0
        %v702 = vmax.f32 %v638, 0.0
        %v703 = vmax.f32 %v639, 0.0
        %v704 = vmax.f32 %v640, 0.0
        %v705 = vmax.f32 %v641, 0.0
        %v706 = vmax.f32 %v642, 0.0
        %v707 = vmax.f32 %v643, 0.0
        %v708 = vmax.f32 %v644, 0.0
        %v709 = vmax.f32 %v645, 0.0
        %v710 = vmax.f32 %v646, 0.0
        %v711 = vmax.f32 %v647, 0.0
        %v712 = vmax.f32 %v648, 0.0
        %v713 = vmax.f32 %v649, 0.0
        %v714 = vmax.f32 %v650, 0.0
        %v715 = vmax.f32 %v651, 0.0
        %v716 = vmax.f32 %v652, 0.0
        %v717 = vmax.f32 %v653, 0.0
        %v718 = vmax.f32 %v654, 0.0
        %v719 = vmax.f32 %v655, 0.0
        %v720 = vmax.f32 %v656, 0.0
        %v721 = vmax.f32 %v657, 0.0
        %v722 = vmax.f32 %v658, 0.0
        %v723 = vmax.f32 %v659, 0.0
        %v724 = vmax.f32 %v660, 0.0
        %v725 = vmax.f32 %v661, 0.0
        %v726 = vmax.f32 %v662, 0.0
        %v727 = vmax.f32 %v663, 0.0
        %v728 = vmax.f32 %v664, 0.0
        %v729 = vmax.f32 %v665, 0.0
        %v730 = vmax.f32 %v666, 0.0
        %v731 = vmax.f32 %v667, 0.0
        %v732 = vmax.f32 %v668, 0.0
        %v733 = vmax.f32 %v669, 0.0
        %v734 = vmax.f32 %v670, 0.0
        %v735 = vmax.f32 %v671, 0.0
        %v736 = vmax.f32 %v672, 0.0
        %v737 = vmax.f32 %v673, 0.0
        %v738 = vmax.f32 %v674, 0.0
        %v739 = vmax.f32 %v675, 0.0
        %v740 = vmax.f32 %v676, 0.0
        %v741 = vmax.f32 %v677, 0.0
        %v742 = vmax.f32 %v678, 0.0
        %v743 = vmax.f32 %v679, 0.0
        %v744 = vmax.f32 %v680, 0.0
        %v745 = vmax.f32 %v681, 0.0
        %v746 = vmax.f32 %v682, 0.0
        %v747 = vmax.f32 %v683, 0.0
        %v748 = vmax.f32 %v684, 0.0
        %v749 = vmax.f32 %v685, 0.0
        %v750 = vmax.f32 %v686, 0.0
        %v751 = vmax.f32 %v687, 0.0
        %v752 = vmax.f32 %v688, 0.0
        %v753 = vmax.f32 %v689, 0.0
        %v754 = vmax.f32 %v690, 0.0
        %v755 = vmax.f32 %v691, 0.0
        %v756 = vmax.f32 %v692, 0.0
        %v757 = vpack.c.bf16 %v697, %v693
        %v758 = vpack.c.bf16 %v698, %v694
        %v759 = vpack.c.bf16 %v699, %v695
        %v760 = vpack.c.bf16 %v700, %v696
        %v761 = vpack.c.bf16 %v705, %v701
        %v762 = vpack.c.bf16 %v706, %v702
        %v763 = vpack.c.bf16 %v707, %v703
        %v764 = vpack.c.bf16 %v708, %v704
        %v765 = vpack.c.bf16 %v713, %v709
        %v766 = vpack.c.bf16 %v714, %v710
        %v767 = vpack.c.bf16 %v715, %v711
        %v768 = vpack.c.bf16 %v716, %v712
        %v769 = vpack.c.bf16 %v721, %v717
        %v770 = vpack.c.bf16 %v722, %v718
        %v771 = vpack.c.bf16 %v723, %v719
        %v772 = vpack.c.bf16 %v724, %v720
        %v773 = vpack.c.bf16 %v729, %v725
        %v774 = vpack.c.bf16 %v730, %v726
        %v775 = vpack.c.bf16 %v731, %v727
        %v776 = vpack.c.bf16 %v732, %v728
        %v777 = vpack.c.bf16 %v737, %v733
        %v778 = vpack.c.bf16 %v738, %v734
        %v779 = vpack.c.bf16 %v739, %v735
        %v780 = vpack.c.bf16 %v740, %v736
        %v781 = vpack.c.bf16 %v745, %v741
        %v782 = vpack.c.bf16 %v746, %v742
        %v783 = vpack.c.bf16 %v747, %v743
        %v784 = vpack.c.bf16 %v748, %v744
        %v785 = vpack.c.bf16 %v753, %v749
        %v786 = vpack.c.bf16 %v754, %v750
        %v787 = vpack.c.bf16 %v755, %v751
        %v788 = vpack.c.bf16 %v756, %v752
        %v789 = vld [vmem:[%s3] sm:$0xf]
        %v790 = vld [vmem:[%s3 + $0x4] sm:$0xf]
        %v791 = vld [vmem:[%s3 + $0x8] sm:$0xf]
        %v792 = vld [vmem:[%s3 + $0xc] sm:$0xf]
        %v793 = vld [vmem:[%s3 + $0x10] sm:$0xf]
        %v794 = vld [vmem:[%s3 + $0x14] sm:$0xf]
        %v795 = vld [vmem:[%s3 + $0x18] sm:$0xf]
        %v796 = vld [vmem:[%s3 + $0x1c] sm:$0xf]
        %v797 = vld [vmem:[%s3 + $0x20] sm:$0xf]
        %v798 = vld [vmem:[%s3 + $0x24] sm:$0xf]
        %v799 = vld [vmem:[%s3 + $0x28] sm:$0xf]
        %v800 = vld [vmem:[%s3 + $0x2c] sm:$0xf]
        %v801 = vld [vmem:[%s3 + $0x30] sm:$0xf]
        %v802 = vld [vmem:[%s3 + $0x34] sm:$0xf]
        %v803 = vld [vmem:[%s3 + $0x38] sm:$0xf]
        %v804 = vld [vmem:[%s3 + $0x3c] sm:$0xf]
        %v805 = vld [vmem:[%s3 + $0x40] sm:$0xf]
        %v806 = vld [vmem:[%s3 + $0x44] sm:$0xf]
        %v807 = vld [vmem:[%s3 + $0x48] sm:$0xf]
        %v808 = vld [vmem:[%s3 + $0x4c] sm:$0xf]
        %v809 = vld [vmem:[%s3 + $0x50] sm:$0xf]
        %v810 = vld [vmem:[%s3 + $0x54] sm:$0xf]
        %v811 = vld [vmem:[%s3 + $0x58] sm:$0xf]
        %v812 = vld [vmem:[%s3 + $0x5c] sm:$0xf]
        %v813 = vld [vmem:[%s3 + $0x60] sm:$0xf]
        %v814 = vld [vmem:[%s3 + $0x64] sm:$0xf]
        %v815 = vld [vmem:[%s3 + $0x68] sm:$0xf]
        %v816 = vld [vmem:[%s3 + $0x6c] sm:$0xf]
        %v817 = vld [vmem:[%s3 + $0x70] sm:$0xf]
        %v818 = vld [vmem:[%s3 + $0x74] sm:$0xf]
        %v819 = vld [vmem:[%s3 + $0x78] sm:$0xf]
        %v820 = vld [vmem:[%s3 + $0x7c] sm:$0xf]
        %v821 = vld [vmem:[%s3 + $0x80] sm:$0xf]
        %v822 = vld [vmem:[%s3 + $0x84] sm:$0xf]
        %v823 = vld [vmem:[%s3 + $0x88] sm:$0xf]
        %v824 = vld [vmem:[%s3 + $0x8c] sm:$0xf]
        %v825 = vld [vmem:[%s3 + $0x90] sm:$0xf]
        %v826 = vld [vmem:[%s3 + $0x94] sm:$0xf]
        %v827 = vld [vmem:[%s3 + $0x98] sm:$0xf]
        %v828 = vld [vmem:[%s3 + $0x9c] sm:$0xf]
        %v829 = vld [vmem:[%s3 + $0xa0] sm:$0xf]
        %v830 = vld [vmem:[%s3 + $0xa4] sm:$0xf]
        %v831 = vld [vmem:[%s3 + $0xa8] sm:$0xf]
        %v832 = vld [vmem:[%s3 + $0xac] sm:$0xf]
        %v833 = vld [vmem:[%s3 + $0xb0] sm:$0xf]
        %v834 = vld [vmem:[%s3 + $0xb4] sm:$0xf]
        %v835 = vld [vmem:[%s3 + $0xb8] sm:$0xf]
        %v836 = vld [vmem:[%s3 + $0xbc] sm:$0xf]
        %v837 = vld [vmem:[%s3 + $0xc0] sm:$0xf]
        %v838 = vld [vmem:[%s3 + $0xc4] sm:$0xf]
        %v839 = vld [vmem:[%s3 + $0xc8] sm:$0xf]
        %v840 = vld [vmem:[%s3 + $0xcc] sm:$0xf]
        %v841 = vld [vmem:[%s3 + $0xd0] sm:$0xf]
        %v842 = vld [vmem:[%s3 + $0xd4] sm:$0xf]
        %v843 = vld [vmem:[%s3 + $0xd8] sm:$0xf]
        %v844 = vld [vmem:[%s3 + $0xdc] sm:$0xf]
        %v845 = vld [vmem:[%s3 + $0xe0] sm:$0xf]
        %v846 = vld [vmem:[%s3 + $0xe4] sm:$0xf]
        %v847 = vld [vmem:[%s3 + $0xe8] sm:$0xf]
        %v848 = vld [vmem:[%s3 + $0xec] sm:$0xf]
        %v849 = vld [vmem:[%s3 + $0xf0] sm:$0xf]
        %v850 = vld [vmem:[%s3 + $0xf4] sm:$0xf]
        %v851 = vld [vmem:[%s3 + $0xf8] sm:$0xf]
        %v852 = vld [vmem:[%s3 + $0xfc] sm:$0xf]
        %v853 = vld [vmem:[%s4] sm:$0x1]
        %v855 = vperm.slane %v853, 0
        %v921 = vunpack.c.l.b16 %v789
        %v922 = vunpack.c.l.b16 %v790
        %v923 = vunpack.c.l.b16 %v791
        %v924 = vunpack.c.l.b16 %v792
        %v925 = vunpack.c.l.b16 %v793
        %v926 = vunpack.c.l.b16 %v794
        %v927 = vunpack.c.l.b16 %v795
        %v928 = vunpack.c.l.b16 %v796
        %v929 = vunpack.c.l.b16 %v797
        %v930 = vunpack.c.l.b16 %v798
        %v931 = vunpack.c.l.b16 %v799
        %v932 = vunpack.c.l.b16 %v800
        %v933 = vunpack.c.l.b16 %v801
        %v934 = vunpack.c.l.b16 %v802
        %v935 = vunpack.c.l.b16 %v803
        %v936 = vunpack.c.l.b16 %v804
        %v937 = vunpack.c.l.b16 %v805
        %v938 = vunpack.c.l.b16 %v806
        %v939 = vunpack.c.l.b16 %v807
        %v940 = vunpack.c.l.b16 %v808
        %v941 = vunpack.c.l.b16 %v809
        %v942 = vunpack.c.l.b16 %v810
        %v943 = vunpack.c.l.b16 %v811
        %v944 = vunpack.c.l.b16 %v812
        %v945 = vunpack.c.l.b16 %v813
        %v946 = vunpack.c.l.b16 %v814
        %v947 = vunpack.c.l.b16 %v815
        %v948 = vunpack.c.l.b16 %v816
        %v949 = vunpack.c.l.b16 %v817
        %v950 = vunpack.c.l.b16 %v818
        %v951 = vunpack.c.l.b16 %v819
        %v952 = vunpack.c.l.b16 %v820
        %v953 = vunpack.c.l.b16 %v821
        %v954 = vunpack.c.l.b16 %v822
        %v955 = vunpack.c.l.b16 %v823
        %v956 = vunpack.c.l.b16 %v824
        %v957 = vunpack.c.l.b16 %v825
        %v958 = vunpack.c.l.b16 %v826
        %v959 = vunpack.c.l.b16 %v827
        %v960 = vunpack.c.l.b16 %v828
        %v961 = vunpack.c.l.b16 %v829
        %v962 = vunpack.c.l.b16 %v830
        %v963 = vunpack.c.l.b16 %v831
        %v964 = vunpack.c.l.b16 %v832
        %v965 = vunpack.c.l.b16 %v833
        %v966 = vunpack.c.l.b16 %v834
        %v967 = vunpack.c.l.b16 %v835
        %v968 = vunpack.c.l.b16 %v836
        %v969 = vunpack.c.l.b16 %v837
        %v970 = vunpack.c.l.b16 %v838
        %v971 = vunpack.c.l.b16 %v839
        %v972 = vunpack.c.l.b16 %v840
        %v973 = vunpack.c.l.b16 %v841
        %v974 = vunpack.c.l.b16 %v842
        %v975 = vunpack.c.l.b16 %v843
        %v976 = vunpack.c.l.b16 %v844
        %v977 = vunpack.c.l.b16 %v845
        %v978 = vunpack.c.l.b16 %v846
        %v979 = vunpack.c.l.b16 %v847
        %v980 = vunpack.c.l.b16 %v848
        %v981 = vunpack.c.l.b16 %v849
        %v982 = vunpack.c.l.b16 %v850
        %v983 = vunpack.c.l.b16 %v851
        %v984 = vunpack.c.l.b16 %v852
        %v985 = vpack.c.b16 %v922, %v921
        %v986 = vpack.c.b16 %v924, %v923
        %v987 = vpack.c.b16 %v926, %v925
        %v988 = vpack.c.b16 %v928, %v927
        %v989 = vpack.c.b16 %v930, %v929
        %v990 = vpack.c.b16 %v932, %v931
        %v991 = vpack.c.b16 %v934, %v933
        %v992 = vpack.c.b16 %v936, %v935
        %v993 = vpack.c.b16 %v938, %v937
        %v994 = vpack.c.b16 %v940, %v939
        %v995 = vpack.c.b16 %v942, %v941
        %v996 = vpack.c.b16 %v944, %v943
        %v997 = vpack.c.b16 %v946, %v945
        %v998 = vpack.c.b16 %v948, %v947
        %v999 = vpack.c.b16 %v950, %v949
        %v1000 = vpack.c.b16 %v952, %v951
        %v1001 = vpack.c.b16 %v954, %v953
        %v1002 = vpack.c.b16 %v956, %v955
        %v1003 = vpack.c.b16 %v958, %v957
        %v1004 = vpack.c.b16 %v960, %v959
        %v1005 = vpack.c.b16 %v962, %v961
        %v1006 = vpack.c.b16 %v964, %v963
        %v1007 = vpack.c.b16 %v966, %v965
        %v1008 = vpack.c.b16 %v968, %v967
        %v1009 = vpack.c.b16 %v970, %v969
        %v1010 = vpack.c.b16 %v972, %v971
        %v1011 = vpack.c.b16 %v974, %v973
        %v1012 = vpack.c.b16 %v976, %v975
        %v1013 = vpack.c.b16 %v978, %v977
        %v1014 = vpack.c.b16 %v980, %v979
        %v1015 = vpack.c.b16 %v982, %v981
        %v1016 = vpack.c.b16 %v984, %v983
        %1049 = vmatpush.bf16.msra.mxu0 %v992
        %1050 = vmatpush.bf16.msra.mxu0 %v991
        %1051 = vmatpush.bf16.msra.mxu0 %v990
        %1052 = vmatpush.bf16.msra.mxu0 %v989
        %1053 = vmatpush.bf16.msra.mxu0 %v988
        %1054 = vmatpush.bf16.msra.mxu0 %v987
        %1055 = vmatpush.bf16.msra.mxu0 %v986
        %1056 = vmatpush.bf16.msra.mxu0 %v985
        %1057 = vmatmul.bf16.gmra.mxu0 %v757
        %v1058 = vpop.f32.mrf.mxu0
        %v1059 = vadd.f32 %v855, %v1058
        %v1060 = vpop.f32.mrf.mxu0
        %v1061 = vadd.f32 %v855, %v1060
        %1062 = vmatmul.bf16.gmra.mxu0 %v761
        %v1063 = vpop.f32.mrf.mxu0
        %v1064 = vadd.f32 %v855, %v1063
        %v1065 = vpop.f32.mrf.mxu0
        %v1066 = vadd.f32 %v855, %v1065
        %1067 = vmatmul.bf16.gmra.mxu0 %v765
        %v1068 = vpop.f32.mrf.mxu0
        %v1069 = vadd.f32 %v855, %v1068
        %v1070 = vpop.f32.mrf.mxu0
        %v1071 = vadd.f32 %v855, %v1070
        %1072 = vmatmul.bf16.gmra.mxu0 %v769
        %v1073 = vpop.f32.mrf.mxu0
        %v1074 = vadd.f32 %v855, %v1073
        %v1075 = vpop.f32.mrf.mxu0
        %v1076 = vadd.f32 %v855, %v1075
        %1077 = vmatmul.bf16.gmra.mxu0 %v773
        %v1078 = vpop.f32.mrf.mxu0
        %v1079 = vadd.f32 %v855, %v1078
        %v1080 = vpop.f32.mrf.mxu0
        %v1081 = vadd.f32 %v855, %v1080
        %1082 = vmatmul.bf16.gmra.mxu0 %v777
        %v1083 = vpop.f32.mrf.mxu0
        %v1084 = vadd.f32 %v855, %v1083
        %v1085 = vpop.f32.mrf.mxu0
        %v1086 = vadd.f32 %v855, %v1085
        %1087 = vmatmul.bf16.gmra.mxu0 %v781
        %v1088 = vpop.f32.mrf.mxu0
        %v1089 = vadd.f32 %v855, %v1088
        %v1090 = vpop.f32.mrf.mxu0
        %v1091 = vadd.f32 %v855, %v1090
        %1092 = vmatmul.bf16.gmra.mxu0 %v785
        %v1093 = vpop.f32.mrf.mxu0
        %v1094 = vadd.f32 %v855, %v1093
        %v1095 = vpop.f32.mrf.mxu0
        %v1096 = vadd.f32 %v855, %v1095
        %1097 = vdwg.mxu0
        %1098 = vmatpush.bf16.msra.mxu0 %v1000
        %1099 = vmatpush.bf16.msra.mxu0 %v999
        %1100 = vmatpush.bf16.msra.mxu0 %v998
        %1101 = vmatpush.bf16.msra.mxu0 %v997
        %1102 = vmatpush.bf16.msra.mxu0 %v996
        %1103 = vmatpush.bf16.msra.mxu0 %v995
        %1104 = vmatpush.bf16.msra.mxu0 %v994
        %1105 = vmatpush.bf16.msra.mxu0 %v993
        %1106 = vmatmul.bf16.gmra.mxu0 %v758
        %v1107 = vpop.f32.mrf.mxu0
        %v1108 = vadd.f32 %v1059, %v1107
        %v1109 = vpop.f32.mrf.mxu0
        %v1110 = vadd.f32 %v1061, %v1109
        %1111 = vmatmul.bf16.gmra.mxu0 %v762
        %v1112 = vpop.f32.mrf.mxu0
        %v1113 = vadd.f32 %v1064, %v1112
        %v1114 = vpop.f32.mrf.mxu0
        %v1115 = vadd.f32 %v1066, %v1114
        %1116 = vmatmul.bf16.gmra.mxu0 %v766
        %v1117 = vpop.f32.mrf.mxu0
        %v1118 = vadd.f32 %v1069, %v1117
        %v1119 = vpop.f32.mrf.mxu0
        %v1120 = vadd.f32 %v1071, %v1119
        %1121 = vmatmul.bf16.gmra.mxu0 %v770
        %v1122 = vpop.f32.mrf.mxu0
        %v1123 = vadd.f32 %v1074, %v1122
        %v1124 = vpop.f32.mrf.mxu0
        %v1125 = vadd.f32 %v1076, %v1124
        %1126 = vmatmul.bf16.gmra.mxu0 %v774
        %v1127 = vpop.f32.mrf.mxu0
        %v1128 = vadd.f32 %v1079, %v1127
        %v1129 = vpop.f32.mrf.mxu0
        %v1130 = vadd.f32 %v1081, %v1129
        %1131 = vmatmul.bf16.gmra.mxu0 %v778
        %v1132 = vpop.f32.mrf.mxu0
        %v1133 = vadd.f32 %v1084, %v1132
        %v1134 = vpop.f32.mrf.mxu0
        %v1135 = vadd.f32 %v1086, %v1134
        %1136 = vmatmul.bf16.gmra.mxu0 %v782
        %v1137 = vpop.f32.mrf.mxu0
        %v1138 = vadd.f32 %v1089, %v1137
        %v1139 = vpop.f32.mrf.mxu0
        %v1140 = vadd.f32 %v1091, %v1139
        %1141 = vmatmul.bf16.gmra.mxu0 %v786
        %v1142 = vpop.f32.mrf.mxu0
        %v1143 = vadd.f32 %v1094, %v1142
        %v1144 = vpop.f32.mrf.mxu0
        %v1145 = vadd.f32 %v1096, %v1144
        %1146 = vdwg.mxu0
        %1147 = vmatpush.bf16.msra.mxu0 %v1008
        %1148 = vmatpush.bf16.msra.mxu0 %v1007
        %1149 = vmatpush.bf16.msra.mxu0 %v1006
        %1150 = vmatpush.bf16.msra.mxu0 %v1005
        %1151 = vmatpush.bf16.msra.mxu0 %v1004
        %1152 = vmatpush.bf16.msra.mxu0 %v1003
        %1153 = vmatpush.bf16.msra.mxu0 %v1002
        %1154 = vmatpush.bf16.msra.mxu0 %v1001
        %1155 = vmatmul.bf16.gmra.mxu0 %v759
        %v1156 = vpop.f32.mrf.mxu0
        %v1157 = vadd.f32 %v1108, %v1156
        %v1158 = vpop.f32.mrf.mxu0
        %v1159 = vadd.f32 %v1110, %v1158
        %1160 = vmatmul.bf16.gmra.mxu0 %v763
        %v1161 = vpop.f32.mrf.mxu0
        %v1162 = vadd.f32 %v1113, %v1161
        %v1163 = vpop.f32.mrf.mxu0
        %v1164 = vadd.f32 %v1115, %v1163
        %1165 = vmatmul.bf16.gmra.mxu0 %v767
        %v1166 = vpop.f32.mrf.mxu0
        %v1167 = vadd.f32 %v1118, %v1166
        %v1168 = vpop.f32.mrf.mxu0
        %v1169 = vadd.f32 %v1120, %v1168
        %1170 = vmatmul.bf16.gmra.mxu0 %v771
        %v1171 = vpop.f32.mrf.mxu0
        %v1172 = vadd.f32 %v1123, %v1171
        %v1173 = vpop.f32.mrf.mxu0
        %v1174 = vadd.f32 %v1125, %v1173
        %1175 = vmatmul.bf16.gmra.mxu0 %v775
        %v1176 = vpop.f32.mrf.mxu0
        %v1177 = vadd.f32 %v1128, %v1176
        %v1178 = vpop.f32.mrf.mxu0
        %v1179 = vadd.f32 %v1130, %v1178
        %1180 = vmatmul.bf16.gmra.mxu0 %v779
        %v1181 = vpop.f32.mrf.mxu0
        %v1182 = vadd.f32 %v1133, %v1181
        %v1183 = vpop.f32.mrf.mxu0
        %v1184 = vadd.f32 %v1135, %v1183
        %1185 = vmatmul.bf16.gmra.mxu0 %v783
        %v1186 = vpop.f32.mrf.mxu0
        %v1187 = vadd.f32 %v1138, %v1186
        %v1188 = vpop.f32.mrf.mxu0
        %v1189 = vadd.f32 %v1140, %v1188
        %1190 = vmatmul.bf16.gmra.mxu0 %v787
        %v1191 = vpop.f32.mrf.mxu0
        %v1192 = vadd.f32 %v1143, %v1191
        %v1193 = vpop.f32.mrf.mxu0
        %v1194 = vadd.f32 %v1145, %v1193
        %1195 = vdwg.mxu0
        %1196 = vmatpush.bf16.msra.mxu0 %v1016
        %1197 = vmatpush.bf16.msra.mxu0 %v1015
        %1198 = vmatpush.bf16.msra.mxu0 %v1014
        %1199 = vmatpush.bf16.msra.mxu0 %v1013
        %1200 = vmatpush.bf16.msra.mxu0 %v1012
        %1201 = vmatpush.bf16.msra.mxu0 %v1011
        %1202 = vmatpush.bf16.msra.mxu0 %v1010
        %1203 = vmatpush.bf16.msra.mxu0 %v1009
        %1204 = vmatmul.bf16.gmra.mxu0 %v760
        %v1205 = vpop.f32.mrf.mxu0
        %v1206 = vadd.f32 %v1157, %v1205
        %v1207 = vpop.f32.mrf.mxu0
        %v1208 = vadd.f32 %v1159, %v1207
        %1209 = vmatmul.bf16.gmra.mxu0 %v764
        %v1210 = vpop.f32.mrf.mxu0
        %v1211 = vadd.f32 %v1162, %v1210
        %v1212 = vpop.f32.mrf.mxu0
        %v1213 = vadd.f32 %v1164, %v1212
        %1214 = vmatmul.bf16.gmra.mxu0 %v768
        %v1215 = vpop.f32.mrf.mxu0
        %v1216 = vadd.f32 %v1167, %v1215
        %v1217 = vpop.f32.mrf.mxu0
        %v1218 = vadd.f32 %v1169, %v1217
        %1219 = vmatmul.bf16.gmra.mxu0 %v772
        %v1220 = vpop.f32.mrf.mxu0
        %v1221 = vadd.f32 %v1172, %v1220
        %v1222 = vpop.f32.mrf.mxu0
        %v1223 = vadd.f32 %v1174, %v1222
        %1224 = vmatmul.bf16.gmra.mxu0 %v776
        %v1225 = vpop.f32.mrf.mxu0
        %v1226 = vadd.f32 %v1177, %v1225
        %v1227 = vpop.f32.mrf.mxu0
        %v1228 = vadd.f32 %v1179, %v1227
        %1229 = vmatmul.bf16.gmra.mxu0 %v780
        %v1230 = vpop.f32.mrf.mxu0
        %v1231 = vadd.f32 %v1182, %v1230
        %v1232 = vpop.f32.mrf.mxu0
        %v1233 = vadd.f32 %v1184, %v1232
        %1234 = vmatmul.bf16.gmra.mxu0 %v784
        %v1235 = vpop.f32.mrf.mxu0
        %v1236 = vadd.f32 %v1187, %v1235
        %v1237 = vpop.f32.mrf.mxu0
        %v1238 = vadd.f32 %v1189, %v1237
        %1239 = vmatmul.bf16.gmra.mxu0 %v788
        %v1240 = vpop.f32.mrf.mxu0
        %v1241 = vadd.f32 %v1192, %v1240
        %v1242 = vpop.f32.mrf.mxu0
        %v1243 = vadd.f32 %v1194, %v1242
        %1244 = vdwg.mxu0
        %1245 = vst [vmem:[%s226] sm:$0xff] %v1206
        %1246 = vst [vmem:[%s226 + $0x8] sm:$0xff] %v1208
        %1247 = vst [vmem:[%s226 + $0x10] sm:$0xff] %v1211
        %1248 = vst [vmem:[%s226 + $0x18] sm:$0xff] %v1213
        %1249 = vst [vmem:[%s226 + $0x20] sm:$0xff] %v1216
        %1250 = vst [vmem:[%s226 + $0x28] sm:$0xff] %v1218
        %1251 = vst [vmem:[%s226 + $0x30] sm:$0xff] %v1221
        %1252 = vst [vmem:[%s226 + $0x38] sm:$0xff] %v1223
        %1253 = vst [vmem:[%s226 + $0x40] sm:$0xff] %v1226
        %1254 = vst [vmem:[%s226 + $0x48] sm:$0xff] %v1228
        %1255 = vst [vmem:[%s226 + $0x50] sm:$0xff] %v1231
        %1256 = vst [vmem:[%s226 + $0x58] sm:$0xff] %v1233
        %1257 = vst [vmem:[%s226 + $0x60] sm:$0xff] %v1236
        %1258 = vst [vmem:[%s226 + $0x68] sm:$0xff] %v1238
        %1259 = vst [vmem:[%s226 + $0x70] sm:$0xff] %v1241
        %1260 = vst [vmem:[%s226 + $0x78] sm:$0xff] %v1243
        %s1261 = sand.u32 %s134, 1
        %s1262 = sand.u32 %s134, 1
        %s1263 = smul.addr %s1262, 128
        %s1264 = scalar_lea.vmem [#allocation2], %s1263
        // Predicated region
        $region41: #{ts_encoder_forward.1} parent=39 // pred_check
          %p1265 = pneg %p144
        $region42: #{ts_encoder_forward.1} parent=39 // pred_check_branch
          %1267 = sbr.rel (%p1265) target = $region44
        $region43: #{ts_encoder_forward.1} parent=39 // pred_region
          %s1268 = smul.u32 16, %s16
          %s1269 = ssub.s32 26, %s1268
          %p1270 = scmp.lt.s32.totalorder %s1269, 16
          %s1271 = scalar_select %p1270, %s1269, 16
          %s1272 = smul.u32 8, %s1271
          %p1273 = scmp.ne.s32.totalorder 0, %s1272
          %s1274 = smul.addr %s1268, 8
          %s1275 = scalar_lea.vmem %s5, %s1274
          // Predicated region
          $region45: #{ts_encoder_forward.1} parent=43 // pred_check
            %p1276 = pneg %p1273
          $region46: #{ts_encoder_forward.1} parent=43 // pred_check_branch
            %1278 = sbr.rel (%p1276) target = $region48
          $region47: #{ts_encoder_forward.1} parent=43 // pred_region
            // Predicated region
            $region49: #{ts_encoder_forward.1} parent=47 // pred_check
              _
            $region50: #{ts_encoder_forward.1} parent=47 // pred_check_branch
              %1280 = sbr.rel (0) target = $region52
            $region51: #{ts_encoder_forward.1} parent=47 // pred_region
              // Predicated region
              $region71: #{ts_encoder_forward.1} parent=51 // pred_check
                _
              $region72: #{ts_encoder_forward.1} parent=51 // pred_check_branch
                %1360 = sbr.rel (0) target = $region74
              $region73: #{ts_encoder_forward.1} parent=51 // pred_region
                %s1361 = sshrl.u32 %s1271, 4
                // While loop
                $region75: #{ts_encoder_forward.1} parent=73 // loop_pre_header
                  _
                $region76: #{ts_encoder_forward.1} parent=73 // loop_header
                  %s1363 = sphi 0, %s1365
                  %p1364 = scmp.ge.s32.totalorder %s1363, %s1361
                  %s1368 = sphi 0, %s1405
                  %s1369 = sphi %s1264, %s1408
                  %s1370 = sphi %s1275, %s1409
                $region77: #{ts_encoder_forward.1} parent=73 // loop_header_branch
                  %1367 = sbr.rel (%p1364) target = $region81
                $region78: #{ts_encoder_forward.1} parent=73 // loop_body
                  %v1371 = vld [vmem:[%s1369] sm:$0xff]
                  %1372 = vst [vmem:[%s1370] sm:$0xff] %v1371
                  %v1373 = vld [vmem:[%s1369 + $0x8] sm:$0xff]
                  %1374 = vst [vmem:[%s1370 + $0x8] sm:$0xff] %v1373
                  %v1375 = vld [vmem:[%s1369 + $0x10] sm:$0xff]
                  %1376 = vst [vmem:[%s1370 + $0x10] sm:$0xff] %v1375
                  %v1377 = vld [vmem:[%s1369 + $0x18] sm:$0xff]
                  %1378 = vst [vmem:[%s1370 + $0x18] sm:$0xff] %v1377
                  %v1379 = vld [vmem:[%s1369 + $0x20] sm:$0xff]
                  %1380 = vst [vmem:[%s1370 + $0x20] sm:$0xff] %v1379
                  %v1381 = vld [vmem:[%s1369 + $0x28] sm:$0xff]
                  %1382 = vst [vmem:[%s1370 + $0x28] sm:$0xff] %v1381
                  %v1383 = vld [vmem:[%s1369 + $0x30] sm:$0xff]
                  %1384 = vst [vmem:[%s1370 + $0x30] sm:$0xff] %v1383
                  %v1385 = vld [vmem:[%s1369 + $0x38] sm:$0xff]
                  %1386 = vst [vmem:[%s1370 + $0x38] sm:$0xff] %v1385
                  %v1387 = vld [vmem:[%s1369 + $0x40] sm:$0xff]
                  %1388 = vst [vmem:[%s1370 + $0x40] sm:$0xff] %v1387
                  %v1389 = vld [vmem:[%s1369 + $0x48] sm:$0xff]
                  %1390 = vst [vmem:[%s1370 + $0x48] sm:$0xff] %v1389
                  %v1391 = vld [vmem:[%s1369 + $0x50] sm:$0xff]
                  %1392 = vst [vmem:[%s1370 + $0x50] sm:$0xff] %v1391
                  %v1393 = vld [vmem:[%s1369 + $0x58] sm:$0xff]
                  %1394 = vst [vmem:[%s1370 + $0x58] sm:$0xff] %v1393
                  %v1395 = vld [vmem:[%s1369 + $0x60] sm:$0xff]
                  %1396 = vst [vmem:[%s1370 + $0x60] sm:$0xff] %v1395
                  %v1397 = vld [vmem:[%s1369 + $0x68] sm:$0xff]
                  %1398 = vst [vmem:[%s1370 + $0x68] sm:$0xff] %v1397
                  %v1399 = vld [vmem:[%s1369 + $0x70] sm:$0xff]
                  %1400 = vst [vmem:[%s1370 + $0x70] sm:$0xff] %v1399
                  %v1401 = vld [vmem:[%s1369 + $0x78] sm:$0xff]
                  %1402 = vst [vmem:[%s1370 + $0x78] sm:$0xff] %v1401
                  %s1403 = sadd.s32 1, %s1368
                  %p1404 = scmp.ge.s32.totalorder %s1403, %s1361
                  %s1405 = scalar_select %p1404, 0, %s1403
                  %s1406 = smul.u32 %s1405, 128
                  %s1407 = smul.u32 %s1405, 128
                  %s1408 = scalar_lea.vmem %s1264, %s1406 [#allocation2]
                  %s1409 = scalar_lea.vmem %s1275, %s1407
                $region79: #{ts_encoder_forward.1} parent=73 // loop_footer
                  %s1365 = sadd.s32 %s1363, 1
                $region80: #{ts_encoder_forward.1} parent=73 // loop_footer_branch
                  %1362 = sbr.rel target = $region76
                $region81: #{ts_encoder_forward.1} parent=73 // loop_exit
                  _
                %s1410 = sshrl.u32 %s1271, 4
                %s1411 = sand.u32 %s1271, 15
                %s1412 = smul.u32 %s1410, 16
                %s1413 = smul.u32 8, %s1412
                %s1414 = scalar_lea.vmem %s1264, %s1413 [#allocation2]
                %s1415 = smul.u32 8, %s1412
                %s1416 = scalar_lea.vmem %s1275, %s1415
                // While loop
                $region82: #{ts_encoder_forward.1} parent=73 // loop_pre_header
                  _
                $region83: #{ts_encoder_forward.1} parent=73 // loop_header
                  %s1418 = sphi 0, %s1420
                  %p1419 = scmp.ge.s32.totalorder %s1418, %s1411
                  %s1423 = sphi 0, %s1430
                  %s1424 = sphi %s1414, %s1433
                  %s1425 = sphi %s1416, %s1434
                $region84: #{ts_encoder_forward.1} parent=73 // loop_header_branch
                  %1422 = sbr.rel (%p1419) target = $region88
                $region85: #{ts_encoder_forward.1} parent=73 // loop_body
                  %v1426 = vld [vmem:[%s1424] sm:$0xff]
                  %1427 = vst [vmem:[%s1425] sm:$0xff] %v1426
                  %s1428 = sadd.s32 1, %s1423
                  %p1429 = scmp.ge.s32.totalorder %s1428, %s1411
                  %s1430 = scalar_select %p1429, 0, %s1428
                  %s1431 = smul.u32 %s1430, 8
                  %s1432 = smul.u32 %s1430, 8
                  %s1433 = scalar_lea.vmem %s1414, %s1431 [#allocation2]
                  %s1434 = scalar_lea.vmem %s1416, %s1432
                $region86: #{ts_encoder_forward.1} parent=73 // loop_footer
                  %s1420 = sadd.s32 %s1418, 1
                $region87: #{ts_encoder_forward.1} parent=73 // loop_footer_branch
                  %1417 = sbr.rel target = $region83
                $region88: #{ts_encoder_forward.1} parent=73 // loop_exit
                  _
              $region74: #{ts_encoder_forward.1} parent=51 // pred_fallthru
                _
              // Predicated region
              $region89: #{ts_encoder_forward.1} parent=51 // pred_check
                _
              $region90: #{ts_encoder_forward.1} parent=51 // pred_check_branch
                %1436 = sbr.rel target = $region92
              $region91: #{ts_encoder_forward.1} parent=51 // pred_region
                _
              $region92: #{ts_encoder_forward.1} parent=51 // pred_fallthru
                _
            $region52: #{ts_encoder_forward.1} parent=47 // pred_fallthru
              _
            // Predicated region
            $region53: #{ts_encoder_forward.1} parent=47 // pred_check
              _
            $region54: #{ts_encoder_forward.1} parent=47 // pred_check_branch
              %1282 = sbr.rel target = $region56
            $region55: #{ts_encoder_forward.1} parent=47 // pred_region
              %s1284 = ssub.s32 256, 1
              %s1285 = sshrl.u32 %s1271, 4
              // While loop
              $region57: #{ts_encoder_forward.1} parent=55 // loop_pre_header
                _
              $region58: #{ts_encoder_forward.1} parent=55 // loop_header
                %s1287 = sphi 0, %s1289
                %p1288 = scmp.ge.s32.totalorder %s1287, %s1285
                %s1292 = sphi 0, %s1329
                %s1293 = sphi %s1264, %s1332
                %s1294 = sphi %s1275, %s1333
              $region59: #{ts_encoder_forward.1} parent=55 // loop_header_branch
                %1291 = sbr.rel (%p1288) target = $region63
              $region60: #{ts_encoder_forward.1} parent=55 // loop_body
                %v1295 = vld [vmem:[%s1293] sm:%s1284]
                %1296 = vst [vmem:[%s1294] sm:%s1284] %v1295
                %v1297 = vld [vmem:[%s1293 + $0x8] sm:%s1284]
                %1298 = vst [vmem:[%s1294 + $0x8] sm:%s1284] %v1297
                %v1299 = vld [vmem:[%s1293 + $0x10] sm:%s1284]
                %1300 = vst [vmem:[%s1294 + $0x10] sm:%s1284] %v1299
                %v1301 = vld [vmem:[%s1293 + $0x18] sm:%s1284]
                %1302 = vst [vmem:[%s1294 + $0x18] sm:%s1284] %v1301
                %v1303 = vld [vmem:[%s1293 + $0x20] sm:%s1284]
                %1304 = vst [vmem:[%s1294 + $0x20] sm:%s1284] %v1303
                %v1305 = vld [vmem:[%s1293 + $0x28] sm:%s1284]
                %1306 = vst [vmem:[%s1294 + $0x28] sm:%s1284] %v1305
                %v1307 = vld [vmem:[%s1293 + $0x30] sm:%s1284]
                %1308 = vst [vmem:[%s1294 + $0x30] sm:%s1284] %v1307
                %v1309 = vld [vmem:[%s1293 + $0x38] sm:%s1284]
                %1310 = vst [vmem:[%s1294 + $0x38] sm:%s1284] %v1309
                %v1311 = vld [vmem:[%s1293 + $0x40] sm:%s1284]
                %1312 = vst [vmem:[%s1294 + $0x40] sm:%s1284] %v1311
                %v1313 = vld [vmem:[%s1293 + $0x48] sm:%s1284]
                %1314 = vst [vmem:[%s1294 + $0x48] sm:%s1284] %v1313
                %v1315 = vld [vmem:[%s1293 + $0x50] sm:%s1284]
                %1316 = vst [vmem:[%s1294 + $0x50] sm:%s1284] %v1315
                %v1317 = vld [vmem:[%s1293 + $0x58] sm:%s1284]
                %1318 = vst [vmem:[%s1294 + $0x58] sm:%s1284] %v1317
                %v1319 = vld [vmem:[%s1293 + $0x60] sm:%s1284]
                %1320 = vst [vmem:[%s1294 + $0x60] sm:%s1284] %v1319
                %v1321 = vld [vmem:[%s1293 + $0x68] sm:%s1284]
                %1322 = vst [vmem:[%s1294 + $0x68] sm:%s1284] %v1321
                %v1323 = vld [vmem:[%s1293 + $0x70] sm:%s1284]
                %1324 = vst [vmem:[%s1294 + $0x70] sm:%s1284] %v1323
                %v1325 = vld [vmem:[%s1293 + $0x78] sm:%s1284]
                %1326 = vst [vmem:[%s1294 + $0x78] sm:%s1284] %v1325
                %s1327 = sadd.s32 1, %s1292
                %p1328 = scmp.ge.s32.totalorder %s1327, %s1285
                %s1329 = scalar_select %p1328, 0, %s1327
                %s1330 = smul.u32 %s1329, 128
                %s1331 = smul.u32 %s1329, 128
                %s1332 = scalar_lea.vmem %s1264, %s1330 [#allocation2]
                %s1333 = scalar_lea.vmem %s1275, %s1331
              $region61: #{ts_encoder_forward.1} parent=55 // loop_footer
                %s1289 = sadd.s32 %s1287, 1
              $region62: #{ts_encoder_forward.1} parent=55 // loop_footer_branch
                %1286 = sbr.rel target = $region58
              $region63: #{ts_encoder_forward.1} parent=55 // loop_exit
                _
              %s1334 = sshrl.u32 %s1271, 4
              %s1335 = sand.u32 %s1271, 15
              %s1336 = smul.u32 %s1334, 16
              %s1337 = smul.u32 8, %s1336
              %s1338 = scalar_lea.vmem %s1264, %s1337 [#allocation2]
              %s1339 = smul.u32 8, %s1336
              %s1340 = scalar_lea.vmem %s1275, %s1339
              // While loop
              $region64: #{ts_encoder_forward.1} parent=55 // loop_pre_header
                _
              $region65: #{ts_encoder_forward.1} parent=55 // loop_header
                %s1342 = sphi 0, %s1344
                %p1343 = scmp.ge.s32.totalorder %s1342, %s1335
                %s1347 = sphi 0, %s1354
                %s1348 = sphi %s1338, %s1357
                %s1349 = sphi %s1340, %s1358
              $region66: #{ts_encoder_forward.1} parent=55 // loop_header_branch
                %1346 = sbr.rel (%p1343) target = $region70
              $region67: #{ts_encoder_forward.1} parent=55 // loop_body
                %v1350 = vld [vmem:[%s1348] sm:%s1284]
                %1351 = vst [vmem:[%s1349] sm:%s1284] %v1350
                %s1352 = sadd.s32 1, %s1347
                %p1353 = scmp.ge.s32.totalorder %s1352, %s1335
                %s1354 = scalar_select %p1353, 0, %s1352
                %s1355 = smul.u32 %s1354, 8
                %s1356 = smul.u32 %s1354, 8
                %s1357 = scalar_lea.vmem %s1338, %s1355 [#allocation2]
                %s1358 = scalar_lea.vmem %s1340, %s1356
              $region68: #{ts_encoder_forward.1} parent=55 // loop_footer
                %s1344 = sadd.s32 %s1342, 1
              $region69: #{ts_encoder_forward.1} parent=55 // loop_footer_branch
                %1341 = sbr.rel target = $region65
              $region70: #{ts_encoder_forward.1} parent=55 // loop_exit
                _
            $region56: #{ts_encoder_forward.1} parent=47 // pred_fallthru
              _
          $region48: #{ts_encoder_forward.1} parent=43 // pred_fallthru
            _
          %1437 = vnop
        $region44: #{ts_encoder_forward.1} parent=39 // pred_fallthru
          _
      $region40: #{ts_encoder_forward.1} parent=5 // pred_fallthru
        _
      %p1438 = scmp.le.s32.totalorder 2, %s11
      // Predicated region
      $region93: #{ts_encoder_forward.1} parent=5 // pred_check
        %p1439 = pneg %p1438
      $region94: #{ts_encoder_forward.1} parent=5 // pred_check_branch
        %1441 = sbr.rel (%p1439) target = $region96
      $region95: #{ts_encoder_forward.1} parent=5 // pred_region
        %s1442 = ssub.s32 %s11, 2
        // Predicated region
        $region97: #{ts_encoder_forward.1} parent=95 // pred_check
          %p1443 = pneg %p150
        $region98: #{ts_encoder_forward.1} parent=95 // pred_check_branch
          %1445 = sbr.rel (%p1443) target = $region100
        $region99: #{ts_encoder_forward.1} parent=95 // pred_region
          %s1446 = sand.u32 %s135, 1
          %s1447 = sand.u32 %s135, 1
          %s1448 = smul.addr %s1447, 128
          %s1449 = scalar_lea.vmem [#allocation2], %s1448
        $region100: #{ts_encoder_forward.1} parent=95 // pred_fallthru
          _
      $region96: #{ts_encoder_forward.1} parent=5 // pred_fallthru
        _
    $region6: #{ts_encoder_forward.1} parent=1 // loop_footer
      %s15 = sadd.s32 1, %s11
    $region7: #{ts_encoder_forward.1} parent=1 // loop_footer_branch
      %10 = sbr.rel target = $region3
    $region8: #{ts_encoder_forward.1} parent=1 // loop_exit
      _

</llo_original>
